<compile_context>
chip_gen: v5e
topology: v5e:2x2
jax: 0.10.0
libtpu: 0.0.40
codegen_flags: <defaults>
</compile_context>

<pallas_src>
import functools

import jax
import jax.numpy as jnp
from jax.experimental import pallas as pl
from jax.experimental.pallas import tpu as pltpu


def _round_up(n, m):
    return ((n + m - 1) // m) * m


def mlp_kernel(x_ref, w1_ref, b1_ref, w2_ref, b2_ref, o_ref):
    """One batch tile of Flatten->Linear->ReLU->(Dropout eval)->Linear->ReLU."""
    # In-kernel f32 -> bf16 cast (VPU op, hidden under the MXU work); avoids an
    # extra HBM pass over x in the wrapper.
    x = x_ref[...].astype(w1_ref.dtype)

    # Hidden layer: bf16 operands on the MXU, f32 accumulation, f32 bias + ReLU.
    h = jnp.dot(x, w1_ref[...], preferred_element_type=jnp.float32)
    h = jnp.maximum(h + b1_ref[...], 0.0)   # b1 is (1, H_pad) -> broadcasts over batch

    # TODO(synk): training-mode dropout (pltpu.prng_* mask + 1/(1-p) scaling); eval mode = identity.

    # Output layer.
    y = jnp.dot(h.astype(w2_ref.dtype), w2_ref[...], preferred_element_type=jnp.float32)
    y = jnp.maximum(y + b2_ref[...], 0.0)   # b2 is (1, C_pad)

    # Store only the real classes (narrow lane-masked store, far fewer HBM bytes
    # than a padded 128-lane f32 slab + wrapper slice read-back).
    o_ref[...] = y[:, : o_ref.shape[1]].astype(o_ref.dtype)


def prepare_params(w1, b1, w2, b2, compute_dtype=jnp.bfloat16):
    """One-time weight prep (call once, reuse across forward calls).

    PyTorch convention in:  w1 (H, F), b1 (H,), w2 (C, H), b2 (C,)
    Kernel convention out:  w1_t (F_pad, H_pad) bf16, b1_r (1, H_pad) f32,
                            w2_t (H_pad, C_pad) bf16, b2_r (1, C_pad) f32
    F/H/C are zero-padded to multiples of 128 so the MXU K dim and all kernel
    lane dims are dense; the zero pads contribute nothing through Linear+ReLU.
    """
    H, F = w1.shape
    C = w2.shape[0]
    F_pad = _round_up(F, 128)
    H_pad = _round_up(H, 128)
    C_pad = _round_up(C, 128)

    w1_t = jnp.zeros((F_pad, H_pad), compute_dtype).at[:F, :H].set(w1.T.astype(compute_dtype))
    b1_r = jnp.zeros((1, H_pad), jnp.float32).at[0, :H].set(b1.astype(jnp.float32))
    w2_t = jnp.zeros((H_pad, C_pad), compute_dtype).at[:H, :C].set(w2.T.astype(compute_dtype))
    b2_r = jnp.zeros((1, C_pad), jnp.float32).at[0, :C].set(b2.astype(jnp.float32))
    return (w1_t, b1_r, w2_t, b2_r), C


@functools.partial(jax.jit, static_argnames=("num_classes", "batch_tile"))
def nonlinear_mlp_forward(x, params, *, num_classes, batch_tile=512):
    """x: (B, ...) any trailing shape (nn.Flatten); params from prepare_params."""
    w1_t, b1_r, w2_t, b2_r = params
    B = x.shape[0]
    x2d = x.reshape(B, -1)                     # nn.Flatten
    F_pad, H_pad = w1_t.shape
    C_pad = w2_t.shape[1]
    C = num_classes

    # Feature (K-dim) padding to the 128-aligned width the weights were prepared
    # with. Prefer doing this ONCE at data-load time upstream; this branch only
    # fires if the caller passed unpadded features (e.g. the demo's F=64).
    if x2d.shape[1] != F_pad:
        x2d = jnp.pad(x2d, ((0, 0), (0, F_pad - x2d.shape[1])))

    # Near-even batch tiles (multiple of 8 = f32 sublane), capped at batch_tile.
    # Ensure >=2 grid steps whenever B permits so the "parallel" batch axis can
    # shard across v7x's two TensorCores (no-op on single-TC v5e/v6e).
    min_tiles = 2 if B >= 16 else 1
    n_target = max(pl.cdiv(B, batch_tile), min_tiles)
    TB = _round_up(pl.cdiv(B, n_target), 8)
    num_tiles = pl.cdiv(B, TB)                 # last tile may be partial; rows are
                                               # independent and OOB writes are dropped

    # TODO(synk): when F or H grows past a few thousand, add a K-reduction grid
    # axis over F (f32 accumulator scratch + pl.when init/finalize) instead of
    # keeping full (F_pad, H_pad) weights VMEM-resident.

    # Explicit VMEM budget (single-buffered weights, double-buffered x/out tiles,
    # in-kernel temps) with ~2x headroom, capped at v7x's 64 MiB per TensorCore.
    w_itemsize = jnp.dtype(w1_t.dtype).itemsize
    weight_bytes = (w1_t.size + w2_t.size) * w_itemsize + (b1_r.size + b2_r.size) * 4
    io_bytes = 2 * TB * F_pad * 4 + 2 * TB * C * 4
    tmp_bytes = TB * (F_pad * w_itemsize + H_pad * 4 + H_pad * w_itemsize + C_pad * 4)
    vmem_limit_bytes = int(min(64 * 2**20,
                               2 * (weight_bytes + io_bytes + tmp_bytes) + (8 << 20)))

    flops = 2 * num_tiles * TB * (F_pad * H_pad + H_pad * C_pad)
    bytes_accessed = (
        x2d.size * x2d.dtype.itemsize
        + w1_t.size * w_itemsize
        + w2_t.size * w_itemsize
        + b1_r.size * 4
        + b2_r.size * 4
        + B * C * 4
    )

    out = pl.pallas_call(
        mlp_kernel,
        out_shape=jax.ShapeDtypeStruct((B, C), jnp.float32),
        grid_spec=pltpu.PrefetchScalarGridSpec(
            num_scalar_prefetch=0,
            grid=(num_tiles,),
            in_specs=[
                # x tile: pipelined (double-buffered) over the batch axis.
                pl.BlockSpec((TB, F_pad), lambda i: (i, 0)),
                # Grid-invariant weights/biases: DMA'd once, single-buffered.
                pl.BlockSpec((F_pad, H_pad), lambda i: (0, 0), pipeline_mode=pl.Buffered(1)),
                pl.BlockSpec((1, H_pad), lambda i: (0, 0), pipeline_mode=pl.Buffered(1)),
                pl.BlockSpec((H_pad, C_pad), lambda i: (0, 0), pipeline_mode=pl.Buffered(1)),
                pl.BlockSpec((1, C_pad), lambda i: (0, 0), pipeline_mode=pl.Buffered(1)),
            ],
            # Narrow (TB, C) output block: block last dim equals the full array
            # extent, so only real class lanes are ever written back to HBM.
            out_specs=pl.BlockSpec((TB, C), lambda i: (i, 0)),
        ),
        compiler_params=pltpu.CompilerParams(
            dimension_semantics=("parallel",),
            vmem_limit_bytes=vmem_limit_bytes,
        ),
        cost_estimate=pl.CostEstimate(
            flops=flops, transcendentals=0, bytes_accessed=bytes_accessed),
    )(x2d, w1_t, b1_r, w2_t, b2_r)

    return out


def init_linear_params(key, in_features, out_features):
    """Deterministic init mimicking nn.Linear default (U(-1/sqrt(fan_in), +1/sqrt(fan_in)))."""
    kw, kb = jax.random.split(key)
    bound = 1.0 / jnp.sqrt(jnp.float32(in_features))
    w = jax.random.uniform(kw, (out_features, in_features), jnp.float32, -bound, bound)
    b = jax.random.uniform(kb, (out_features,), jnp.float32, -bound, bound)
    return w, b


if __name__ == "__main__":
    # Small shapes consistent with the module: batch=2, "signal" of 4 channels x 16
    # samples flattened -> input_features=64, hidden=32, num_classes=8.
    batch = 2
    channels = 4
    seq = 16
    input_features = channels * seq   # 64
    hidden_size = 32
    num_classes = 8
    dropout = 0.1  # identity at inference

    key = jax.random.PRNGKey(0)
    kx, k1, k2 = jax.random.split(key, 3)

    x = jax.random.normal(kx, (batch, channels, seq), jnp.float32)
    w1, b1 = init_linear_params(k1, input_features, hidden_size)
    w2, b2 = init_linear_params(k2, hidden_size, num_classes)

    # One-time weight prep (transpose + 128-aligned zero padding + bf16 cast).
    params, _ = prepare_params(w1, b1, w2, b2)

    out = nonlinear_mlp_forward(x, params, num_classes=num_classes)
    jax.block_until_ready(out)

    # Pure-JAX f32 reference of the same forward pass (kernel path uses bf16
    # operands with f32 accumulation -> loosened tolerance).
    x2d = x.reshape(batch, -1)
    ref = jnp.maximum(x2d @ w1.T + b1, 0.0)
    ref = jnp.maximum(ref @ w2.T + b2, 0.0)
    assert out.shape == (batch, num_classes)
    assert jnp.allclose(out, ref, atol=3e-2, rtol=3e-2), float(jnp.max(jnp.abs(out - ref)))

    print("KERNEL_OK")
</pallas_src>

<mosaic_0001>
module attributes {stable_mosaic.version = 11 : i64} {
  func.func @mlp_kernel(%arg0: i32, %arg1: memref<8x128xf32, #tpu.memory_space<vmem>>, %arg2: memref<128x128xbf16, #tpu.memory_space<vmem>>, %arg3: memref<1x128xf32, #tpu.memory_space<vmem>>, %arg4: memref<128x128xbf16, #tpu.memory_space<vmem>>, %arg5: memref<1x128xf32, #tpu.memory_space<vmem>>, %arg6: memref<8x8xf32, #tpu.memory_space<vmem>>) attributes {dimension_semantics = [#tpu.dimension_semantics<parallel>], iteration_bounds = array<i64: 1>, scalar_prefetch = 0 : i64, scratch_operands = 0 : i64, tpu.core_type = #tpu.core_type<tc>, window_params = [{transform_indices = @transform_0, window_bounds = array<i64: 8, 128>}, {pipeline_mode = #tpu.pipeline_mode<synchronous>, transform_indices = @transform_1, window_bounds = array<i64: 128, 128>}, {pipeline_mode = #tpu.pipeline_mode<synchronous>, transform_indices = @transform_2, window_bounds = array<i64: 1, 128>}, {pipeline_mode = #tpu.pipeline_mode<synchronous>, transform_indices = @transform_3, window_bounds = array<i64: 128, 128>}, {pipeline_mode = #tpu.pipeline_mode<synchronous>, transform_indices = @transform_4, window_bounds = array<i64: 1, 128>}, {transform_indices = @transform_5, window_bounds = array<i64: 8, 8>}]} {
    %c0 = arith.constant 0 : index
    %c0_0 = arith.constant 0 : index
    %0 = vector.load %arg1[%c0, %c0_0] : memref<8x128xf32, #tpu.memory_space<vmem>>, vector<8x128xf32>
    %1 = arith.truncf %0 : vector<8x128xf32> to vector<8x128xbf16>
    %c0_1 = arith.constant 0 : index
    %c0_2 = arith.constant 0 : index
    %2 = vector.load %arg2[%c0_1, %c0_2] : memref<128x128xbf16, #tpu.memory_space<vmem>>, vector<128x128xbf16>
    %cst = arith.constant dense<0.000000e+00> : vector<8x128xf32>
    %3 = tpu.matmul %1, %2, %cst {dimension_numbers = #tpu.dot_dimension_numbers<[1], [0], [0], [1], [0, 0, 1, 1], [], []>} : vector<8x128xbf16>, vector<128x128xbf16>, vector<8x128xf32> -> vector<8x128xf32>
    %c0_3 = arith.constant 0 : index
    %c0_4 = arith.constant 0 : index
    %4 = vector.load %arg3[%c0_3, %c0_4] : memref<1x128xf32, #tpu.memory_space<vmem>>, vector<1x128xf32>
    %5 = vector.broadcast %4 : vector<1x128xf32> to vector<8x128xf32>
    %6 = arith.addf %3, %5 : vector<8x128xf32>
    %cst_5 = arith.constant 0.000000e+00 : f32
    %7 = vector.broadcast %cst_5 : f32 to vector<8x128xf32>
    %8 = arith.maximumf %6, %7 : vector<8x128xf32>
    %9 = arith.truncf %8 : vector<8x128xf32> to vector<8x128xbf16>
    %c0_6 = arith.constant 0 : index
    %c0_7 = arith.constant 0 : index
    %10 = vector.load %arg4[%c0_6, %c0_7] : memref<128x128xbf16, #tpu.memory_space<vmem>>, vector<128x128xbf16>
    %cst_8 = arith.constant dense<0.000000e+00> : vector<8x128xf32>
    %11 = tpu.matmul %9, %10, %cst_8 {dimension_numbers = #tpu.dot_dimension_numbers<[1], [0], [0], [1], [0, 0, 1, 1], [], []>} : vector<8x128xbf16>, vector<128x128xbf16>, vector<8x128xf32> -> vector<8x128xf32>
    %c0_9 = arith.constant 0 : index
    %c0_10 = arith.constant 0 : index
    %12 = vector.load %arg5[%c0_9, %c0_10] : memref<1x128xf32, #tpu.memory_space<vmem>>, vector<1x128xf32>
    %13 = vector.broadcast %12 : vector<1x128xf32> to vector<8x128xf32>
    %14 = arith.addf %11, %13 : vector<8x128xf32>
    %cst_11 = arith.constant 0.000000e+00 : f32
    %15 = vector.broadcast %cst_11 : f32 to vector<8x128xf32>
    %16 = arith.maximumf %14, %15 : vector<8x128xf32>
    %17 = vector.extract_strided_slice %16 {offsets = [0, 0], sizes = [8, 8], strides = [1, 1]} : vector<8x128xf32> to vector<8x8xf32>
    %c0_12 = arith.constant 0 : index
    %c0_13 = arith.constant 0 : index
    %18 = vector.load %arg6[%c0_12, %c0_13] : memref<8x8xf32, #tpu.memory_space<vmem>>, vector<8x8xf32>
    tpu.vector_store %arg6[%c0_12, %c0_13], %17 {strides = array<i32>} : memref<8x8xf32, #tpu.memory_space<vmem>>, vector<8x8xf32>,
    return
  }
  func.func @transform_0(%arg0: i32) -> (i32, i32) {
    %c0_i32 = arith.constant 0 : i32
    %c0_i32_0 = arith.constant 0 : i32
    return %arg0, %c0_i32 : i32, i32
  }
  func.func @transform_1(%arg0: i32) -> (i32, i32) {
    %c0_i32 = arith.constant 0 : i32
    %c0_i32_0 = arith.constant 0 : i32
    %c0_i32_1 = arith.constant 0 : i32
    return %c0_i32, %c0_i32_0 : i32, i32
  }
  func.func @transform_2(%arg0: i32) -> (i32, i32) {
    %c0_i32 = arith.constant 0 : i32
    %c0_i32_0 = arith.constant 0 : i32
    %c0_i32_1 = arith.constant 0 : i32
    return %c0_i32, %c0_i32_0 : i32, i32
  }
  func.func @transform_3(%arg0: i32) -> (i32, i32) {
    %c0_i32 = arith.constant 0 : i32
    %c0_i32_0 = arith.constant 0 : i32
    %c0_i32_1 = arith.constant 0 : i32
    return %c0_i32, %c0_i32_0 : i32, i32
  }
  func.func @transform_4(%arg0: i32) -> (i32, i32) {
    %c0_i32 = arith.constant 0 : i32
    %c0_i32_0 = arith.constant 0 : i32
    %c0_i32_1 = arith.constant 0 : i32
    return %c0_i32, %c0_i32_0 : i32, i32
  }
  func.func @transform_5(%arg0: i32) -> (i32, i32) {
    %c0_i32 = arith.constant 0 : i32
    %c0_i32_0 = arith.constant 0 : i32
    return %arg0, %c0_i32 : i32, i32
  }
}

</mosaic_0001>

<llo_original>
// kernel: nonlinear_mlp_forward.1
$region0: #{nonlinear_mlp_forward.1}
  #allocation0 [shape = 'u32[]', space=smem, size = 0x4, offset = 0x4, fixed_abs, tag = 'smem constant byte address 0x4 - core index']
  #allocation1 [shape = 'u32[72,128]{1,0:T(1,128)}', space=vmem, size = 0x9000, scoped, tag = 'internal scratch']
  %s0 = inlined_call_operand.vmem [shape: f32[2,128], index: 0, kind: input, shape index: {}]
  %s1 = inlined_call_operand.hbm [shape: bf16[128,128], index: 1, kind: input, shape index: {}]
  %s2 = inlined_call_operand.vmem [shape: f32[1,128], index: 2, kind: input, shape index: {}]
  %s3 = inlined_call_operand.hbm [shape: bf16[128,128], index: 3, kind: input, shape index: {}]
  %s4 = inlined_call_operand.vmem [shape: f32[1,128], index: 4, kind: input, shape index: {}]
  %s5 = inlined_call_operand.hbm [shape: f32[2,8], index: 5, kind: output, shape index: {}]
  %s6 = sld [smem:[#allocation0]]
  $region38: #{nonlinear_mlp_forward.1} parent=0
    _
  %s8 = ssub.s32 1, %s6
  %s9 = scalar_select 0, %s8, %s6
  $region1: #{nonlinear_mlp_forward.1} parent=0
    #allocation2 [shape = 'u8[32768]{0}', space=vmem, size = 0x8000, scoped, tag = 'input window, operand 1, single buffered']
    #allocation3 [shape = 's32[1]{0}', space=sflag, size = 0x4, scoped, tag = 'scoped memory for nonlinear_mlp_forward.1']
    #allocation4 [shape = 's32[1]{0}', space=sflag, size = 0x4, scoped, tag = 'scoped memory for nonlinear_mlp_forward.1']
    #allocation5 [shape = 'u8[32768]{0}', space=vmem, size = 0x8000, scoped, tag = 'input window, operand 3, single buffered']
    #allocation6 [shape = 's32[1]{0}', space=sflag, size = 0x4, scoped, tag = 'scoped memory for nonlinear_mlp_forward.1']
    #allocation7 [shape = 'u8[4096]{0}', space=vmem, size = 0x1000, scoped, tag = 'output window, operand 0, single buffered']
    %10 = vsyncpa [#allocation3], 0
    %11 = vsyncpa [#allocation6], 0
    %12 = vsyncpa [#allocation4], 0
    // Predicated region
    $region2: #{nonlinear_mlp_forward.1} parent=1 // pred_check
      _
    $region3: #{nonlinear_mlp_forward.1} parent=1 // pred_check_branch
      %14 = sbr.rel (0) target = $region5
    $region4: #{nonlinear_mlp_forward.1} parent=1 // pred_region
      _
    $region5: #{nonlinear_mlp_forward.1} parent=1 // pred_fallthru
      _
    // Predicated region
    $region6: #{nonlinear_mlp_forward.1} parent=1 // pred_check
      _
    $region7: #{nonlinear_mlp_forward.1} parent=1 // pred_check_branch
      %16 = sbr.rel (0) target = $region9
    $region8: #{nonlinear_mlp_forward.1} parent=1 // pred_region
      %18 = vsyncadd [#allocation3], 0
      %s19 = sshll.u32 %s1, 4
      %s20 = int_to_ptr.hbm [resolvable:$true] %s19
      %s21 = sshll.u32 [#allocation2], 4
      %s22 = int_to_ptr.vmem [resolvable:$true] %s21
      %27 = dma.hbm_to_vmem [thread:$0]  %s20, 1024, %s22, [#allocation3], 64, 64, 4
    $region9: #{nonlinear_mlp_forward.1} parent=1 // pred_fallthru
      _
    // Predicated region
    $region10: #{nonlinear_mlp_forward.1} parent=1 // pred_check
      _
    $region11: #{nonlinear_mlp_forward.1} parent=1 // pred_check_branch
      %29 = sbr.rel (0) target = $region13
    $region12: #{nonlinear_mlp_forward.1} parent=1 // pred_region
      _
    $region13: #{nonlinear_mlp_forward.1} parent=1 // pred_fallthru
      _
    // Predicated region
    $region14: #{nonlinear_mlp_forward.1} parent=1 // pred_check
      _
    $region15: #{nonlinear_mlp_forward.1} parent=1 // pred_check_branch
      %31 = sbr.rel (0) target = $region17
    $region16: #{nonlinear_mlp_forward.1} parent=1 // pred_region
      %33 = vsyncadd [#allocation6], 0
      %s34 = sshll.u32 %s3, 4
      %s35 = int_to_ptr.hbm [resolvable:$true] %s34
      %s36 = sshll.u32 [#allocation5], 4
      %s37 = int_to_ptr.vmem [resolvable:$true] %s36
      %42 = dma.hbm_to_vmem [thread:$0]  %s35, 1024, %s37, [#allocation6], 64, 64, 4
    $region17: #{nonlinear_mlp_forward.1} parent=1 // pred_fallthru
      _
    // Predicated region
    $region18: #{nonlinear_mlp_forward.1} parent=1 // pred_check
      _
    $region19: #{nonlinear_mlp_forward.1} parent=1 // pred_check_branch
      %44 = sbr.rel (0) target = $region21
    $region20: #{nonlinear_mlp_forward.1} parent=1 // pred_region
      _
    $region21: #{nonlinear_mlp_forward.1} parent=1 // pred_fallthru
      _
    // Predicated region
    $region22: #{nonlinear_mlp_forward.1} parent=1 // pred_check
      _
    $region23: #{nonlinear_mlp_forward.1} parent=1 // pred_check_branch
      %46 = sbr.rel (0) target = $region25
    $region24: #{nonlinear_mlp_forward.1} parent=1 // pred_region
      %48 = dma.done [#allocation3], 1024
    $region25: #{nonlinear_mlp_forward.1} parent=1 // pred_fallthru
      _
    // Predicated region
    $region26: #{nonlinear_mlp_forward.1} parent=1 // pred_check
      _
    $region27: #{nonlinear_mlp_forward.1} parent=1 // pred_check_branch
      %50 = sbr.rel (0) target = $region29
    $region28: #{nonlinear_mlp_forward.1} parent=1 // pred_region
      %52 = dma.done [#allocation6], 1024
    $region29: #{nonlinear_mlp_forward.1} parent=1 // pred_fallthru
      _
    %v53 = vld [vmem:[%s0] sm:$0xff]
    %v54 = vpack.c.bf16 %v53, %v53
    %v55 = vld [vmem:[#allocation2] sm:$0xf]
    %v56 = vld [vmem:[#allocation2 + $0x4] sm:$0xf]
    %v57 = vld [vmem:[#allocation2 + $0x8] sm:$0xf]
    %v58 = vld [vmem:[#allocation2 + $0xc] sm:$0xf]
    %v59 = vld [vmem:[#allocation2 + $0x10] sm:$0xf]
    %v60 = vld [vmem:[#allocation2 + $0x14] sm:$0xf]
    %v61 = vld [vmem:[#allocation2 + $0x18] sm:$0xf]
    %v62 = vld [vmem:[#allocation2 + $0x1c] sm:$0xf]
    %v63 = vld [vmem:[#allocation2 + $0x20] sm:$0xf]
    %v64 = vld [vmem:[#allocation2 + $0x24] sm:$0xf]
    %v65 = vld [vmem:[#allocation2 + $0x28] sm:$0xf]
    %v66 = vld [vmem:[#allocation2 + $0x2c] sm:$0xf]
    %v67 = vld [vmem:[#allocation2 + $0x30] sm:$0xf]
    %v68 = vld [vmem:[#allocation2 + $0x34] sm:$0xf]
    %v69 = vld [vmem:[#allocation2 + $0x38] sm:$0xf]
    %v70 = vld [vmem:[#allocation2 + $0x3c] sm:$0xf]
    %v71 = vld [vmem:[%s2] sm:$0x1]
    %v73 = vperm.slane %v71, 0
    %v91 = vunpack.c.l.b16 %v55
    %v92 = vunpack.c.l.b16 %v56
    %v93 = vunpack.c.l.b16 %v57
    %v94 = vunpack.c.l.b16 %v58
    %v95 = vunpack.c.l.b16 %v59
    %v96 = vunpack.c.l.b16 %v60
    %v97 = vunpack.c.l.b16 %v61
    %v98 = vunpack.c.l.b16 %v62
    %v99 = vunpack.c.l.b16 %v63
    %v100 = vunpack.c.l.b16 %v64
    %v101 = vunpack.c.l.b16 %v65
    %v102 = vunpack.c.l.b16 %v66
    %v103 = vunpack.c.l.b16 %v67
    %v104 = vunpack.c.l.b16 %v68
    %v105 = vunpack.c.l.b16 %v69
    %v106 = vunpack.c.l.b16 %v70
    %v107 = vpack.c.b16 %v92, %v91
    %v108 = vpack.c.b16 %v94, %v93
    %v109 = vpack.c.b16 %v96, %v95
    %v110 = vpack.c.b16 %v98, %v97
    %v111 = vpack.c.b16 %v100, %v99
    %v112 = vpack.c.b16 %v102, %v101
    %v113 = vpack.c.b16 %v104, %v103
    %v114 = vpack.c.b16 %v106, %v105
    %123 = vmatpush.bf16.msra.mxu0 %v114
    %124 = vmatpush.bf16.msra.mxu0 %v113
    %125 = vmatpush.bf16.msra.mxu0 %v112
    %126 = vmatpush.bf16.msra.mxu0 %v111
    %127 = vmatpush.bf16.msra.mxu0 %v110
    %128 = vmatpush.bf16.msra.mxu0 %v109
    %129 = vmatpush.bf16.msra.mxu0 %v108
    %130 = vmatpush.bf16.msra.mxu0 %v107
    %131 = vmatmul.bf16.gmra.mxu0 %v54
    %v132 = vpop.f32.mrf.mxu0
    %v133 = vadd.f32 %v73, %v132
    %v134 = vpop.f32.mrf.mxu0
    %135 = vdwg.mxu0
    %v136 = vmax.f32 %v133, 0.0
    %v137 = vpack.c.bf16 %v136, %v136
    %v138 = vld [vmem:[#allocation5] sm:$0xf]
    %v139 = vld [vmem:[#allocation5 + $0x4] sm:$0xf]
    %v140 = vld [vmem:[#allocation5 + $0x8] sm:$0xf]
    %v141 = vld [vmem:[#allocation5 + $0xc] sm:$0xf]
    %v142 = vld [vmem:[#allocation5 + $0x10] sm:$0xf]
    %v143 = vld [vmem:[#allocation5 + $0x14] sm:$0xf]
    %v144 = vld [vmem:[#allocation5 + $0x18] sm:$0xf]
    %v145 = vld [vmem:[#allocation5 + $0x1c] sm:$0xf]
    %v146 = vld [vmem:[#allocation5 + $0x20] sm:$0xf]
    %v147 = vld [vmem:[#allocation5 + $0x24] sm:$0xf]
    %v148 = vld [vmem:[#allocation5 + $0x28] sm:$0xf]
    %v149 = vld [vmem:[#allocation5 + $0x2c] sm:$0xf]
    %v150 = vld [vmem:[#allocation5 + $0x30] sm:$0xf]
    %v151 = vld [vmem:[#allocation5 + $0x34] sm:$0xf]
    %v152 = vld [vmem:[#allocation5 + $0x38] sm:$0xf]
    %v153 = vld [vmem:[#allocation5 + $0x3c] sm:$0xf]
    %v154 = vld [vmem:[%s4] sm:$0x1]
    %v156 = vperm.slane %v154, 0
    %v174 = vunpack.c.l.b16 %v138
    %v175 = vunpack.c.l.b16 %v139
    %v176 = vunpack.c.l.b16 %v140
    %v177 = vunpack.c.l.b16 %v141
    %v178 = vunpack.c.l.b16 %v142
    %v179 = vunpack.c.l.b16 %v143
    %v180 = vunpack.c.l.b16 %v144
    %v181 = vunpack.c.l.b16 %v145
    %v182 = vunpack.c.l.b16 %v146
    %v183 = vunpack.c.l.b16 %v147
    %v184 = vunpack.c.l.b16 %v148
    %v185 = vunpack.c.l.b16 %v149
    %v186 = vunpack.c.l.b16 %v150
    %v187 = vunpack.c.l.b16 %v151
    %v188 = vunpack.c.l.b16 %v152
    %v189 = vunpack.c.l.b16 %v153
    %v190 = vpack.c.b16 %v175, %v174
    %v191 = vpack.c.b16 %v177, %v176
    %v192 = vpack.c.b16 %v179, %v178
    %v193 = vpack.c.b16 %v181, %v180
    %v194 = vpack.c.b16 %v183, %v182
    %v195 = vpack.c.b16 %v185, %v184
    %v196 = vpack.c.b16 %v187, %v186
    %v197 = vpack.c.b16 %v189, %v188
    %206 = vmatpush.bf16.msra.mxu0 %v197
    %207 = vmatpush.bf16.msra.mxu0 %v196
    %208 = vmatpush.bf16.msra.mxu0 %v195
    %209 = vmatpush.bf16.msra.mxu0 %v194
    %210 = vmatpush.bf16.msra.mxu0 %v193
    %211 = vmatpush.bf16.msra.mxu0 %v192
    %212 = vmatpush.bf16.msra.mxu0 %v191
    %213 = vmatpush.bf16.msra.mxu0 %v190
    %214 = vmatmul.bf16.gmra.mxu0 %v137
    %v215 = vpop.f32.mrf.mxu0
    %v216 = vadd.f32 %v156, %v215
    %v217 = vpop.f32.mrf.mxu0
    %218 = vdwg.mxu0
    %v219 = vmax.f32 %v216, 0.0
    %vm220 = vcmask 64512
    %221 = vst.msk [vmem:[#allocation7] sm:$0xff] %vm220, %v219
    // Predicated region
    $region30: #{nonlinear_mlp_forward.1} parent=1 // pred_check
      _
    $region31: #{nonlinear_mlp_forward.1} parent=1 // pred_check_branch
      %223 = sbr.rel (0) target = $region33
    $region32: #{nonlinear_mlp_forward.1} parent=1 // pred_region
      %225 = vsyncadd [#allocation4], 96
      %s226 = sshll.u32 [#allocation7], 4
      %s227 = int_to_ptr.vmem [resolvable:$true] %s226
      %s228 = sshll.u32 %s5, 4
      %s229 = int_to_ptr.hbm [resolvable:$true] %s228
      %234 = dma.vmem_to_hbm [thread:$0]  %s227, 32, %s229, [#allocation4], 32, 32, 2
    $region33: #{nonlinear_mlp_forward.1} parent=1 // pred_fallthru
      _
    // Predicated region
    $region34: #{nonlinear_mlp_forward.1} parent=1 // pred_check
      _
    $region35: #{nonlinear_mlp_forward.1} parent=1 // pred_check_branch
      %236 = sbr.rel (0) target = $region37
    $region36: #{nonlinear_mlp_forward.1} parent=1 // pred_region
      %238 = dma.done [#allocation4], 128
    $region37: #{nonlinear_mlp_forward.1} parent=1 // pred_fallthru
      _
    %239 = vsyncpa [#allocation3], 1
    %240 = vsyncpa [#allocation6], 1
    %241 = vsyncpa [#allocation4], 1

</llo_original>
